<compile_context>
chip_gen: v5e
topology: v5e:2x2
jax: 0.10.0
libtpu: 0.0.40
codegen_flags: <defaults>
</compile_context>

<pallas_src>
import functools
import math

import jax
import jax.numpy as jnp
from jax import lax
from jax.experimental import pallas as pl
from jax.experimental.pallas import tpu as pltpu


# ----------------------------------------------------------------------------
# Parameter / buffer setup (equivalent of PositionalEncoding.__init__)
# ----------------------------------------------------------------------------
def make_positional_encoding_table(max_len, nhid, dtype=jnp.float32):
    """Builds pe buffer of shape (max_len, 1, nhid), same as the torch module."""
    position = jnp.arange(max_len, dtype=jnp.float32)[:, None]               # (L, 1)
    div_term = jnp.exp(
        jnp.arange(0, nhid, 2, dtype=jnp.float32) * (-math.log(10000.0) / nhid)
    )                                                                         # (H/2,)
    ang = position * div_term                                                 # (L, H/2)
    pe = jnp.zeros((max_len, nhid), jnp.float32)
    pe = pe.at[:, 0::2].set(jnp.sin(ang))
    pe = pe.at[:, 1::2].set(jnp.cos(ang))
    return pe[:, None, :].astype(dtype)                                       # (L, 1, H)


# ----------------------------------------------------------------------------
# Counter-based dropout hash (shared by kernel and the test reference)
# ----------------------------------------------------------------------------
_GOLDEN = 0x9E3779B9


def _hash_u32(x):
    """'lowbias32' integer finalizer; uint32 wrapping arithmetic, VPU-only ops."""
    x = x ^ (x >> 16)
    x = x * jnp.uint32(0x7FEB352D)
    x = x ^ (x >> 15)
    x = x * jnp.uint32(0x846CA68B)
    x = x ^ (x >> 16)
    return x


def _keep_mask_from_index(flat_idx_u32, seed_u32, threshold_u32):
    bits = _hash_u32(flat_idx_u32 ^ (seed_u32 * jnp.uint32(_GOLDEN)))
    return bits >= threshold_u32   # P(drop) = threshold / 2^32  ~= p


def _dropout_threshold(p):
    return jnp.uint32(min(int(float(p) * 4294967296.0), 4294967295))


# ----------------------------------------------------------------------------
# Kernels
# ----------------------------------------------------------------------------
def _pe_add_kernel(x_ref, pe_ref, o_ref):
    # x_ref: (ts, B, H), pe_ref: (ts, 1, H) -> broadcast over batch axis.
    # NOTE: for peak store bandwidth H should be a multiple of 128 (lane-dense).
    o_ref[...] = x_ref[...] + pe_ref[...]


def _pe_add_dropout_kernel(seed_ref, x_ref, pe_ref, o_ref, *, p):
    y = x_ref[...] + pe_ref[...]                       # (ts, B, H)
    ts, B, H = y.shape

    # Global element index (independent of tiling / grid execution order).
    row_off = pl.program_id(0) * ts
    r = lax.broadcasted_iota(jnp.int32, (ts, B, H), 0) + row_off
    b = lax.broadcasted_iota(jnp.int32, (ts, B, H), 1)
    h = lax.broadcasted_iota(jnp.int32, (ts, B, H), 2)
    idx = ((r * B + b) * H + h).astype(jnp.uint32)

    seed_u = seed_ref[0].astype(jnp.uint32)
    keep = _keep_mask_from_index(idx, seed_u, _dropout_threshold(p))

    scale = jnp.asarray(1.0 / (1.0 - p), dtype=y.dtype)
    o_ref[...] = jnp.where(keep, y * scale, jnp.zeros((), y.dtype)).astype(o_ref.dtype)


# ----------------------------------------------------------------------------
# Tiling heuristics
# ----------------------------------------------------------------------------
def _pick_seq_tile(S, row_bytes, target_block_bytes=2 << 20):
    """Largest divisor of S whose block is <= ~2 MiB (full S if input is small)."""
    total = S * row_bytes
    if total <= 2 * target_block_bytes:
        return S                       # tiny input: one step, no pipelining benefit
    cap = max(1, target_block_bytes // row_bytes)
    best = 1
    for ts in range(1, S + 1):
        if ts > cap:
            break
        if S % ts == 0:
            best = ts
    return best


# ----------------------------------------------------------------------------
# Wrapper (equivalent of PositionalEncoding.forward)
# ----------------------------------------------------------------------------
def positional_encoding_forward(x, pe, *, dropout_p=0.1, training=False,
                                seed=0, seq_tile=None):
    """x: (S, B, H); pe: (max_len, 1, H). Returns dropout(x + pe[:S])."""
    S, B, H = x.shape
    # Slice and cast once in the wrapper (no per-tile VPU convert in the kernel).
    pe_s = pe[:S].astype(x.dtype)                      # (S, 1, H)

    itemsize = jnp.dtype(x.dtype).itemsize
    ts = _pick_seq_tile(S, B * H * itemsize) if seq_tile is None else seq_tile
    assert S % ts == 0, "seq_tile must divide S"
    grid = (S // ts,)

    # Double-buffered working set: 2 * (x block + out block + pe block).
    block_bytes = 2 * (2 * ts * B * H * itemsize + ts * H * itemsize)
    vmem_limit = int(min(48 << 20, max(16 << 20, 4 * block_bytes)))
    cparams = pltpu.CompilerParams(
        dimension_semantics=("parallel",),             # tiles independent -> v7x megacore
        vmem_limit_bytes=vmem_limit,
    )

    out_shape = jax.ShapeDtypeStruct((S, B, H), x.dtype)

    if (not training) or dropout_p <= 0.0:
        # Dropout is identity in eval mode; still tiled/pipelined.
        return pl.pallas_call(
            _pe_add_kernel,
            grid=grid,
            in_specs=[
                pl.BlockSpec((ts, B, H), lambda i: (i, 0, 0)),
                pl.BlockSpec((ts, 1, H), lambda i: (i, 0, 0)),
            ],
            out_specs=pl.BlockSpec((ts, B, H), lambda i: (i, 0, 0)),
            out_shape=out_shape,
            compiler_params=cparams,
        )(x, pe_s)

    seed_arr = jnp.asarray([seed], dtype=jnp.int32)
    kernel = functools.partial(_pe_add_dropout_kernel, p=float(dropout_p))
    grid_spec = pltpu.PrefetchScalarGridSpec(
        num_scalar_prefetch=1,
        grid=grid,
        in_specs=[
            pl.BlockSpec((ts, B, H), lambda i, seed: (i, 0, 0)),
            pl.BlockSpec((ts, 1, H), lambda i, seed: (i, 0, 0)),
        ],
        out_specs=pl.BlockSpec((ts, B, H), lambda i, seed: (i, 0, 0)),
    )
    return pl.pallas_call(
        kernel,
        grid_spec=grid_spec,
        out_shape=out_shape,
        compiler_params=cparams,
    )(seed_arr, x, pe_s)


# ----------------------------------------------------------------------------
# Demo / smoke test
# ----------------------------------------------------------------------------
if __name__ == "__main__":
    S, B, H = 8, 2, 32          # seq=8, batch=2, nhid=32
    MAX_LEN = 64
    DROPOUT = 0.1
    SEED = 1234

    key = jax.random.PRNGKey(0)
    x = jax.random.normal(key, (S, B, H), dtype=jnp.float32)
    pe = make_positional_encoding_table(MAX_LEN, H)
    y_ref = x + pe[:S]

    # Eval mode (dropout = identity): check against a pure-JAX reference.
    y_eval = positional_encoding_forward(x, pe, dropout_p=DROPOUT, training=False)
    y_eval = jax.block_until_ready(y_eval)
    assert y_eval.shape == (S, B, H)
    assert jnp.allclose(y_eval, y_ref, atol=1e-6, rtol=1e-6)

    # Training mode (in-kernel counter-based dropout, deterministic seed).
    y_train = positional_encoding_forward(
        x, pe, dropout_p=DROPOUT, training=True, seed=SEED)
    y_train = jax.block_until_ready(y_train)
    assert y_train.shape == (S, B, H)

    # Reconstruct the exact keep mask with the same hash in pure JAX.
    flat_idx = jnp.arange(S * B * H, dtype=jnp.int32).reshape(S, B, H).astype(jnp.uint32)
    keep_ref = _keep_mask_from_index(flat_idx, jnp.uint32(SEED),
                                     _dropout_threshold(DROPOUT))
    expected_train = jnp.where(keep_ref, y_ref * (1.0 / (1.0 - DROPOUT)), 0.0)
    assert jnp.allclose(y_train, expected_train, atol=1e-5, rtol=1e-5)

    print("KERNEL_OK")
</pallas_src>

<mosaic_0001>
module attributes {stable_mosaic.version = 11 : i64} {
  func.func @_pe_add_kernel(%arg0: i32, %arg1: memref<8x2x32xf32, #tpu.memory_space<vmem>>, %arg2: memref<8x1x32xf32, #tpu.memory_space<vmem>>, %arg3: memref<8x2x32xf32, #tpu.memory_space<vmem>>) attributes {dimension_semantics = [#tpu.dimension_semantics<parallel>], iteration_bounds = array<i64: 1>, scalar_prefetch = 0 : i64, scratch_operands = 0 : i64, tpu.core_type = #tpu.core_type<tc>, window_params = [{transform_indices = @transform_0, window_bounds = array<i64: 8, 2, 32>}, {transform_indices = @transform_1, window_bounds = array<i64: 8, 1, 32>}, {transform_indices = @transform_2, window_bounds = array<i64: 8, 2, 32>}]} {
    %c0 = arith.constant 0 : index
    %c0_0 = arith.constant 0 : index
    %c0_1 = arith.constant 0 : index
    %0 = vector.load %arg1[%c0, %c0_0, %c0_1] : memref<8x2x32xf32, #tpu.memory_space<vmem>>, vector<8x2x32xf32>
    %c0_2 = arith.constant 0 : index
    %c0_3 = arith.constant 0 : index
    %c0_4 = arith.constant 0 : index
    %1 = vector.load %arg2[%c0_2, %c0_3, %c0_4] : memref<8x1x32xf32, #tpu.memory_space<vmem>>, vector<8x1x32xf32>
    %2 = vector.broadcast %1 : vector<8x1x32xf32> to vector<8x2x32xf32>
    %3 = arith.addf %0, %2 : vector<8x2x32xf32>
    %c0_5 = arith.constant 0 : index
    %c0_6 = arith.constant 0 : index
    %c0_7 = arith.constant 0 : index
    %4 = vector.load %arg3[%c0_5, %c0_6, %c0_7] : memref<8x2x32xf32, #tpu.memory_space<vmem>>, vector<8x2x32xf32>
    tpu.vector_store %arg3[%c0_5, %c0_6, %c0_7], %3 {strides = array<i32>} : memref<8x2x32xf32, #tpu.memory_space<vmem>>, vector<8x2x32xf32>,
    return
  }
  func.func @transform_0(%arg0: i32) -> (i32, i32, i32) {
    %c0_i32 = arith.constant 0 : i32
    %c0_i32_0 = arith.constant 0 : i32
    %c0_i32_1 = arith.constant 0 : i32
    return %arg0, %c0_i32, %c0_i32_0 : i32, i32, i32
  }
  func.func @transform_1(%arg0: i32) -> (i32, i32, i32) {
    %c0_i32 = arith.constant 0 : i32
    %c0_i32_0 = arith.constant 0 : i32
    %c0_i32_1 = arith.constant 0 : i32
    return %arg0, %c0_i32, %c0_i32_0 : i32, i32, i32
  }
  func.func @transform_2(%arg0: i32) -> (i32, i32, i32) {
    %c0_i32 = arith.constant 0 : i32
    %c0_i32_0 = arith.constant 0 : i32
    %c0_i32_1 = arith.constant 0 : i32
    return %arg0, %c0_i32, %c0_i32_0 : i32, i32, i32
  }
}

</mosaic_0001>

<llo_original>
// kernel: tpu_custom_call.1
$region0: #{tpu_custom_call.1}
  #allocation0 [shape = 'u32[]', space=smem, size = 0x4, offset = 0x4, fixed_abs, tag = 'smem constant byte address 0x4 - core index']
  #allocation1 [shape = 'u32[72,128]{1,0:T(1,128)}', space=vmem, size = 0x9000, scoped, tag = 'internal scratch']
  %s0 = inlined_call_operand.hbm [shape: f32[8,2,32], index: 0, kind: input, shape index: {}]
  %s1 = inlined_call_operand.hbm [shape: f32[8,1,32], index: 1, kind: input, shape index: {}]
  %s2 = inlined_call_operand.hbm [shape: f32[8,2,32], index: 2, kind: output, shape index: {}]
  %s3 = sld [smem:[#allocation0]]
  $region26: #{tpu_custom_call.1} parent=0
    _
  %s5 = ssub.s32 1, %s3
  %s6 = scalar_select 0, %s5, %s3
  $region1: #{tpu_custom_call.1} parent=0
    #allocation2 [shape = 'u8[8192]{0}', space=vmem, size = 0x2000, scoped, tag = 'input window, operand 0, single buffered']
    #allocation3 [shape = 's32[1]{0}', space=sflag, size = 0x4, scoped, tag = 'scoped memory for tpu_custom_call.1']
    #allocation4 [shape = 's32[1]{0}', space=sflag, size = 0x4, scoped, tag = 'scoped memory for tpu_custom_call.1']
    #allocation5 [shape = 'u8[4096]{0}', space=vmem, size = 0x1000, scoped, tag = 'input window, operand 1, single buffered']
    #allocation6 [shape = 's32[1]{0}', space=sflag, size = 0x4, scoped, tag = 'scoped memory for tpu_custom_call.1']
    #allocation7 [shape = 'u8[8192]{0}', space=vmem, size = 0x2000, scoped, tag = 'output window, operand 0, single buffered']
    %7 = vsyncpa [#allocation3], 0
    %8 = vsyncpa [#allocation6], 0
    %9 = vsyncpa [#allocation4], 0
    // Predicated region
    $region2: #{tpu_custom_call.1} parent=1 // pred_check
      _
    $region3: #{tpu_custom_call.1} parent=1 // pred_check_branch
      %11 = sbr.rel (0) target = $region5
    $region4: #{tpu_custom_call.1} parent=1 // pred_region
      %13 = vsyncadd [#allocation3], 0
      %s14 = sshll.u32 %s0, 4
      %s15 = int_to_ptr.hbm [resolvable:$true] %s14
      %s16 = sshll.u32 [#allocation2], 4
      %s17 = int_to_ptr.vmem [resolvable:$true] %s16
      %22 = dma.hbm_to_vmem [thread:$0]  %s15, 256, %s17, [#allocation3], 32, 32, 2
    $region5: #{tpu_custom_call.1} parent=1 // pred_fallthru
      _
    // Predicated region
    $region6: #{tpu_custom_call.1} parent=1 // pred_check
      _
    $region7: #{tpu_custom_call.1} parent=1 // pred_check_branch
      %24 = sbr.rel (0) target = $region9
    $region8: #{tpu_custom_call.1} parent=1 // pred_region
      %26 = vsyncadd [#allocation6], 0
      %s27 = sshll.u32 %s1, 4
      %s28 = int_to_ptr.hbm [resolvable:$true] %s27
      %s29 = sshll.u32 [#allocation5], 4
      %s30 = int_to_ptr.vmem [resolvable:$true] %s29
      %35 = dma.hbm_to_vmem [thread:$0]  %s28, 128, %s30, [#allocation6], 16, 16, 1
    $region9: #{tpu_custom_call.1} parent=1 // pred_fallthru
      _
    // Predicated region
    $region10: #{tpu_custom_call.1} parent=1 // pred_check
      _
    $region11: #{tpu_custom_call.1} parent=1 // pred_check_branch
      %37 = sbr.rel (0) target = $region13
    $region12: #{tpu_custom_call.1} parent=1 // pred_region
      %39 = dma.done [#allocation3], 256
    $region13: #{tpu_custom_call.1} parent=1 // pred_fallthru
      _
    // Predicated region
    $region14: #{tpu_custom_call.1} parent=1 // pred_check
      _
    $region15: #{tpu_custom_call.1} parent=1 // pred_check_branch
      %41 = sbr.rel (0) target = $region17
    $region16: #{tpu_custom_call.1} parent=1 // pred_region
      %43 = dma.done [#allocation6], 128
    $region17: #{tpu_custom_call.1} parent=1 // pred_fallthru
      _
    %v44 = vld [vmem:[#allocation2] sm:$0x3]
    %v45 = vld [vmem:[#allocation2 + $0x2] sm:$0x3]
    %v46 = vld [vmem:[#allocation2 + $0x4] sm:$0x3]
    %v47 = vld [vmem:[#allocation2 + $0x6] sm:$0x3]
    %v48 = vld [vmem:[#allocation2 + $0x8] sm:$0x3]
    %v49 = vld [vmem:[#allocation2 + $0xa] sm:$0x3]
    %v50 = vld [vmem:[#allocation2 + $0xc] sm:$0x3]
    %v51 = vld [vmem:[#allocation2 + $0xe] sm:$0x3]
    %v52 = vld [vmem:[#allocation5] sm:$0x1]
    %v53 = vld [vmem:[#allocation5 + $0x1] sm:$0x1]
    %v54 = vld [vmem:[#allocation5 + $0x2] sm:$0x1]
    %v55 = vld [vmem:[#allocation5 + $0x3] sm:$0x1]
    %v56 = vld [vmem:[#allocation5 + $0x4] sm:$0x1]
    %v57 = vld [vmem:[#allocation5 + $0x5] sm:$0x1]
    %v58 = vld [vmem:[#allocation5 + $0x6] sm:$0x1]
    %v59 = vld [vmem:[#allocation5 + $0x7] sm:$0x1]
    %v68 = vperm.slane %v52, 0
    %v69 = vperm.slane %v53, 0
    %v70 = vperm.slane %v54, 0
    %v71 = vperm.slane %v55, 0
    %v72 = vperm.slane %v56, 0
    %v73 = vperm.slane %v57, 0
    %v74 = vperm.slane %v58, 0
    %v75 = vperm.slane %v59, 0
    %v84 = vadd.f32 %v44, %v68
    %v85 = vadd.f32 %v45, %v69
    %v86 = vadd.f32 %v46, %v70
    %v87 = vadd.f32 %v47, %v71
    %v88 = vadd.f32 %v48, %v72
    %v89 = vadd.f32 %v49, %v73
    %v90 = vadd.f32 %v50, %v74
    %v91 = vadd.f32 %v51, %v75
    %vm92 = vcmask 254976
    %93 = vst.msk [vmem:[#allocation7] sm:$0x3] %vm92, %v84
    %94 = vst.msk [vmem:[#allocation7 + $0x2] sm:$0x3] %vm92, %v85
    %95 = vst.msk [vmem:[#allocation7 + $0x4] sm:$0x3] %vm92, %v86
    %96 = vst.msk [vmem:[#allocation7 + $0x6] sm:$0x3] %vm92, %v87
    %97 = vst.msk [vmem:[#allocation7 + $0x8] sm:$0x3] %vm92, %v88
    %98 = vst.msk [vmem:[#allocation7 + $0xa] sm:$0x3] %vm92, %v89
    %99 = vst.msk [vmem:[#allocation7 + $0xc] sm:$0x3] %vm92, %v90
    %100 = vst.msk [vmem:[#allocation7 + $0xe] sm:$0x3] %vm92, %v91
    // Predicated region
    $region18: #{tpu_custom_call.1} parent=1 // pred_check
      _
    $region19: #{tpu_custom_call.1} parent=1 // pred_check_branch
      %102 = sbr.rel (0) target = $region21
    $region20: #{tpu_custom_call.1} parent=1 // pred_region
      %104 = vsyncadd [#allocation4], 0
      %s105 = sshll.u32 [#allocation7], 4
      %s106 = int_to_ptr.vmem [resolvable:$true] %s105
      %s107 = sshll.u32 %s2, 4
      %s108 = int_to_ptr.hbm [resolvable:$true] %s107
      %113 = dma.vmem_to_hbm [thread:$0]  %s106, 256, %s108, [#allocation4], 32, 32, 2
    $region21: #{tpu_custom_call.1} parent=1 // pred_fallthru
      _
    // Predicated region
    $region22: #{tpu_custom_call.1} parent=1 // pred_check
      _
    $region23: #{tpu_custom_call.1} parent=1 // pred_check_branch
      %115 = sbr.rel (0) target = $region25
    $region24: #{tpu_custom_call.1} parent=1 // pred_region
      %117 = dma.done [#allocation4], 256
    $region25: #{tpu_custom_call.1} parent=1 // pred_fallthru
      _
    %118 = vsyncpa [#allocation3], 1
    %119 = vsyncpa [#allocation6], 1
    %120 = vsyncpa [#allocation4], 1

</llo_original>
